<compile_context>
chip_gen: v6e
topology: v6e:2x2x1
jax: 0.10.0
libtpu: 0.0.40
codegen_flags: <defaults>
</compile_context>

<pallas_src>
import jax
import jax.numpy as jnp
import numpy as np
from jax import lax
from jax.experimental import pallas as pl
from jax.experimental.pallas import tpu as pltpu


def _round_up(x, m):
    return ((x + m - 1) // m) * m


def _pick_lo_tile(Lo, target=512):
    """Largest multiple-of-8 divisor of Lo that is <= target (whole Lo if it already fits)."""
    if Lo <= target:
        return Lo
    t = target - (target % 8)
    while t >= 8:
        if Lo % t == 0:
            return t
        t -= 8
    # TODO(synk): ragged last tile not supported; fall back to a whole-sequence block.
    return Lo


def _make_convblock_kernel(Lo_T, Cin, Cout_p, K, mp, h, out_dtype):
    pad = K // 2
    # When the per-tap contraction is already MXU-deep, skip the lane-axis im2col concat and
    # issue K accumulating matmuls instead (review optimization #4).
    split_taps = (Cin % 128 == 0)

    def kernel(x_ref, w_ref, b_ref, o_ref):
        # x_ref: (1, 1, mp, Lo_T + 2h, Cin) bf16  -- phase-split, halo-padded tile
        # w_ref: (K*Cin, Cout_p)            bf16  -- im2col weights, BN scale folded in
        # b_ref: (1, Cout_p)                f32   -- folded eval-mode BN bias
        # o_ref: (1, Lo_T, Cout_p)
        pooled = None
        for j in range(mp):                        # static: pooling phase of the conv output
            if split_taps:
                conv = None
                for k in range(K):                 # K accumulating matmuls, no lane concat
                    q = j + k - pad
                    p, d = q % mp, q // mp
                    tap = x_ref[0, 0, p, d + h:d + h + Lo_T, :]
                    part = jnp.dot(tap, w_ref[k * Cin:(k + 1) * Cin, :],
                                   preferred_element_type=jnp.float32)
                    conv = part if conv is None else conv + part
            else:
                taps = []
                for k in range(K):                 # static: conv taps -> one fused matmul
                    q = j + k - pad
                    p, d = q % mp, q // mp         # source phase / row offset (halo'd, in-bounds)
                    taps.append(x_ref[0, 0, p, d + h:d + h + Lo_T, :])
                slab = jnp.concatenate(taps, axis=-1)                 # (Lo_T, K*Cin) bf16
                conv = jnp.dot(slab, w_ref[...],
                               preferred_element_type=jnp.float32)    # (Lo_T, Cout_p) f32
            pooled = conv if pooled is None else jnp.maximum(pooled, conv)   # MaxPool over phases
        # relu(x + b) is monotone non-decreasing in x, so BN-bias + ReLU commute with the
        # phase max: one epilogue add/ReLU pass instead of mp of them.
        o_ref[0] = jnp.maximum(pooled + b_ref[...], 0.0).astype(out_dtype)

    return kernel


def convblock_forward(x_ncl, params, kernel_size, mp_factor, *,
                      out_dtype=jnp.float32, lo_tile_target=512):
    """x_ncl: (N, C_in, L) float32 (PyTorch Conv1d layout). Returns (N, C_out, L // mp_factor)."""
    N, Cin, L = x_ncl.shape
    K, mp = kernel_size, mp_factor
    assert K % 2 == 1, "padding=K//2 preserves length only for odd kernel_size (PyTorch parity)"
    assert L % mp == 0, "sequence length must be divisible by mp_factor"
    Lo = L // mp
    pad = K // 2
    h = -(-pad // mp)                              # halo rows per phase = ceil(pad / mp)
    Cout = params["conv_w"].shape[0]

    # Lane-dense (128) output padding only when it does not blow up write-back bytes.
    if Cout % 128 == 0 or Cout < 64:
        Cout_p = Cout
    else:
        Cout_p = _round_up(Cout, 128)

    Lo_T = _pick_lo_tile(Lo, lo_tile_target)       # bound per-step VMEM; enables real pipelining
    nL = Lo // Lo_T

    # BN (eval mode) folded into per-channel scale/bias; the scale is folded into the weights.
    eps = 1e-5
    s = (params["bn_gamma"] / jnp.sqrt(params["bn_var"] + eps)).astype(jnp.float32)
    b = (params["bn_beta"].astype(jnp.float32) - params["bn_mean"].astype(jnp.float32) * s)

    # Conv weight (Cout, Cin, K) -> im2col (K*Cin, Cout), BN scale folded (conv is linear), bf16.
    w = jnp.transpose(params["conv_w"].astype(jnp.float32), (2, 1, 0)).reshape(K * Cin, Cout)
    w = w * s[None, :]
    if Cout_p != Cout:
        w = jnp.pad(w, ((0, 0), (0, Cout_p - Cout)))   # padded channels stay exactly 0
        b = jnp.pad(b, (0, Cout_p - Cout))
    w_p = w.astype(jnp.bfloat16)
    b_p = b.reshape(1, Cout_p)

    # Phase de-interleave (layout plumbing): x_ph[n, p, m, c] = x[n, c, m*mp + p], as bf16.
    x_ph = (jnp.transpose(x_ncl, (0, 2, 1)).reshape(N, Lo, mp, Cin)
            .transpose(0, 2, 1, 3).astype(jnp.bfloat16))          # (N, mp, Lo, Cin)
    # Global halo zero-pad (matches Conv1d 'same' zero padding at the sequence ends).
    if h > 0:
        x_ph = jnp.pad(x_ph, ((0, 0), (0, 0), (h, h), (0, 0)))
    # Materialize per-tile halo'd slabs so tap reads are plain in-bounds static slices.
    # Duplicated HBM bytes: 2h rows per tile of Lo_T -> negligible for realistic tiles.
    row_idx = jnp.arange(nL)[:, None] * Lo_T + jnp.arange(Lo_T + 2 * h)[None, :]
    x_tiles = jnp.transpose(x_ph[:, :, row_idx, :], (0, 2, 1, 3, 4))  # (N, nL, mp, Lo_T+2h, Cin)

    kernel = _make_convblock_kernel(Lo_T, Cin, Cout_p, K, mp, h, out_dtype)

    out_nlc = pl.pallas_call(
        kernel,
        out_shape=jax.ShapeDtypeStruct((N, Lo, Cout_p), out_dtype),
        grid_spec=pltpu.PrefetchScalarGridSpec(
            num_scalar_prefetch=0,
            grid=(N, nL),
            in_specs=[
                pl.BlockSpec((1, 1, mp, Lo_T + 2 * h, Cin),
                             lambda n, l: (n, l, 0, 0, 0)),        # halo'd phase-split tile
                pl.BlockSpec((K * Cin, Cout_p), lambda n, l: (0, 0)),   # fused conv+BN weights
                pl.BlockSpec((1, Cout_p), lambda n, l: (0, 0)),         # folded BN bias
            ],
            out_specs=pl.BlockSpec((1, Lo_T, Cout_p), lambda n, l: (n, l, 0)),
        ),
        compiler_params=pltpu.CompilerParams(
            # Independent (batch, Lo-tile) work items: shard over megacore / v7x's 2 TCs.
            dimension_semantics=("parallel", "parallel"),
            # Above the 16/32 MiB scoped defaults, below v7x's 64 MiB physical VMEM.
            vmem_limit_bytes=48 * 1024 * 1024,
        ),
    )(x_tiles, w_p, b_p)

    if Cout_p != Cout:
        out_nlc = out_nlc[:, :, :Cout]             # strip channel padding
    return jnp.transpose(out_nlc, (0, 2, 1))       # back to NCL


def convblock_reference(x, params, kernel_size, mp_factor):
    """Pure-JAX reference in NCL layout (mirrors the PyTorch forward, BN in eval mode)."""
    eps = 1e-5
    K, mp = kernel_size, mp_factor
    pad = K // 2
    dn = ('NCH', 'OIH', 'NCH')
    out = lax.conv_general_dilated(x, params["conv_w"], (1,), [(pad, pad)],
                                   dimension_numbers=dn)
    out = ((out - params["bn_mean"][None, :, None])
           / jnp.sqrt(params["bn_var"][None, :, None] + eps)
           * params["bn_gamma"][None, :, None] + params["bn_beta"][None, :, None])
    out = jax.nn.relu(out)
    N, Co, L = out.shape
    return out.reshape(N, Co, L // mp, mp).max(axis=-1)


if __name__ == "__main__":
    N, Cin, Cout, L, K, mp = 2, 4, 8, 16, 3, 2
    key = jax.random.PRNGKey(0)
    ks = jax.random.split(key, 6)

    x = jax.random.normal(ks[0], (N, Cin, L), jnp.float32)
    params = {
        "conv_w": 0.2 * jax.random.normal(ks[1], (Cout, Cin, K), jnp.float32),
        "bn_gamma": 1.0 + 0.1 * jax.random.normal(ks[2], (Cout,), jnp.float32),
        "bn_beta": 0.1 * jax.random.normal(ks[3], (Cout,), jnp.float32),
        "bn_mean": 0.1 * jax.random.normal(ks[4], (Cout,), jnp.float32),
        "bn_var": 1.0 + 0.1 * jnp.abs(jax.random.normal(ks[5], (Cout,), jnp.float32)),
    }

    out = convblock_forward(x, params, K, mp)
    out = jax.block_until_ready(out)

    ref = convblock_reference(x, params, K, mp)
    assert out.shape == (N, Cout, L // mp), out.shape
    # bf16 MXU operands / bf16 input DMA with f32 accumulation -> loose tolerance vs f32 ref.
    np.testing.assert_allclose(np.asarray(out), np.asarray(ref), rtol=2e-2, atol=2e-2)

    print("KERNEL_OK")
</pallas_src>

<mosaic_0001>
module attributes {stable_mosaic.version = 11 : i64} {
  func.func @kernel(%arg0: i32, %arg1: i32, %arg2: memref<1x1x2x10x4xbf16, #tpu.memory_space<vmem>>, %arg3: memref<12x8xbf16, #tpu.memory_space<vmem>>, %arg4: memref<1x8xf32, #tpu.memory_space<vmem>>, %arg5: memref<1x8x8xf32, #tpu.memory_space<vmem>>) attributes {dimension_semantics = [#tpu.dimension_semantics<parallel>, #tpu.dimension_semantics<parallel>], iteration_bounds = array<i64: 2, 1>, scalar_prefetch = 0 : i64, scratch_operands = 0 : i64, tpu.core_type = #tpu.core_type<tc>, window_params = [{transform_indices = @transform_0, window_bounds = array<i64: 1, 1, 2, 10, 4>}, {pipeline_mode = #tpu.pipeline_mode<synchronous>, transform_indices = @transform_1, window_bounds = array<i64: 12, 8>}, {pipeline_mode = #tpu.pipeline_mode<synchronous>, transform_indices = @transform_2, window_bounds = array<i64: 1, 8>}, {transform_indices = @transform_3, window_bounds = array<i64: 1, 8, 8>}]} {
    %c0 = arith.constant 0 : index
    %c0_0 = arith.constant 0 : index
    %c1 = arith.constant 1 : index
    %c0_1 = arith.constant 0 : index
    %c0_2 = arith.constant 0 : index
    %0 = vector.load %arg2[%c0, %c0_0, %c1, %c0_1, %c0_2] : memref<1x1x2x10x4xbf16, #tpu.memory_space<vmem>>, vector<1x1x1x8x4xbf16>
    %1 = vector.shape_cast %0 : vector<1x1x1x8x4xbf16> to vector<8x4xbf16>
    %c0_3 = arith.constant 0 : index
    %c0_4 = arith.constant 0 : index
    %c0_5 = arith.constant 0 : index
    %c1_6 = arith.constant 1 : index
    %c0_7 = arith.constant 0 : index
    %2 = vector.load %arg2[%c0_3, %c0_4, %c0_5, %c1_6, %c0_7] : memref<1x1x2x10x4xbf16, #tpu.memory_space<vmem>>, vector<1x1x1x8x4xbf16>
    %3 = vector.shape_cast %2 : vector<1x1x1x8x4xbf16> to vector<8x4xbf16>
    %c0_8 = arith.constant 0 : index
    %c0_9 = arith.constant 0 : index
    %c1_10 = arith.constant 1 : index
    %c1_11 = arith.constant 1 : index
    %c0_12 = arith.constant 0 : index
    %4 = vector.load %arg2[%c0_8, %c0_9, %c1_10, %c1_11, %c0_12] : memref<1x1x2x10x4xbf16, #tpu.memory_space<vmem>>, vector<1x1x1x8x4xbf16>
    %5 = vector.shape_cast %4 : vector<1x1x1x8x4xbf16> to vector<8x4xbf16>
    %6 = tpu.concatenate %1, %3, %5 in 1 : vector<8x4xbf16>, vector<8x4xbf16>, vector<8x4xbf16> -> vector<8x12xbf16>
    %c0_13 = arith.constant 0 : index
    %c0_14 = arith.constant 0 : index
    %7 = vector.load %arg3[%c0_13, %c0_14] : memref<12x8xbf16, #tpu.memory_space<vmem>>, vector<12x8xbf16>
    %cst = arith.constant dense<0.000000e+00> : vector<8x8xf32>
    %8 = tpu.matmul %6, %7, %cst {dimension_numbers = #tpu.dot_dimension_numbers<[1], [0], [0], [1], [0, 0, 1, 1], [], []>} : vector<8x12xbf16>, vector<12x8xbf16>, vector<8x8xf32> -> vector<8x8xf32>
    %c0_15 = arith.constant 0 : index
    %c0_16 = arith.constant 0 : index
    %c0_17 = arith.constant 0 : index
    %c1_18 = arith.constant 1 : index
    %c0_19 = arith.constant 0 : index
    %9 = vector.load %arg2[%c0_15, %c0_16, %c0_17, %c1_18, %c0_19] : memref<1x1x2x10x4xbf16, #tpu.memory_space<vmem>>, vector<1x1x1x8x4xbf16>
    %10 = vector.shape_cast %9 : vector<1x1x1x8x4xbf16> to vector<8x4xbf16>
    %c0_20 = arith.constant 0 : index
    %c0_21 = arith.constant 0 : index
    %c1_22 = arith.constant 1 : index
    %c1_23 = arith.constant 1 : index
    %c0_24 = arith.constant 0 : index
    %11 = vector.load %arg2[%c0_20, %c0_21, %c1_22, %c1_23, %c0_24] : memref<1x1x2x10x4xbf16, #tpu.memory_space<vmem>>, vector<1x1x1x8x4xbf16>
    %12 = vector.shape_cast %11 : vector<1x1x1x8x4xbf16> to vector<8x4xbf16>
    %c0_25 = arith.constant 0 : index
    %c0_26 = arith.constant 0 : index
    %c0_27 = arith.constant 0 : index
    %c2 = arith.constant 2 : index
    %c0_28 = arith.constant 0 : index
    %13 = vector.load %arg2[%c0_25, %c0_26, %c0_27, %c2, %c0_28] : memref<1x1x2x10x4xbf16, #tpu.memory_space<vmem>>, vector<1x1x1x8x4xbf16>
    %14 = vector.shape_cast %13 : vector<1x1x1x8x4xbf16> to vector<8x4xbf16>
    %15 = tpu.concatenate %10, %12, %14 in 1 : vector<8x4xbf16>, vector<8x4xbf16>, vector<8x4xbf16> -> vector<8x12xbf16>
    %c0_29 = arith.constant 0 : index
    %c0_30 = arith.constant 0 : index
    %16 = vector.load %arg3[%c0_29, %c0_30] : memref<12x8xbf16, #tpu.memory_space<vmem>>, vector<12x8xbf16>
    %cst_31 = arith.constant dense<0.000000e+00> : vector<8x8xf32>
    %17 = tpu.matmul %15, %16, %cst_31 {dimension_numbers = #tpu.dot_dimension_numbers<[1], [0], [0], [1], [0, 0, 1, 1], [], []>} : vector<8x12xbf16>, vector<12x8xbf16>, vector<8x8xf32> -> vector<8x8xf32>
    %18 = arith.maximumf %8, %17 : vector<8x8xf32>
    %c0_32 = arith.constant 0 : index
    %c0_33 = arith.constant 0 : index
    %19 = vector.load %arg4[%c0_32, %c0_33] : memref<1x8xf32, #tpu.memory_space<vmem>>, vector<1x8xf32>
    %20 = vector.broadcast %19 : vector<1x8xf32> to vector<8x8xf32>
    %21 = arith.addf %18, %20 : vector<8x8xf32>
    %cst_34 = arith.constant 0.000000e+00 : f32
    %22 = vector.broadcast %cst_34 : f32 to vector<8x8xf32>
    %23 = arith.maximumf %21, %22 : vector<8x8xf32>
    %c0_35 = arith.constant 0 : index
    %c0_36 = arith.constant 0 : index
    %c0_37 = arith.constant 0 : index
    %24 = vector.load %arg5[%c0_35, %c0_36, %c0_37] : memref<1x8x8xf32, #tpu.memory_space<vmem>>, vector<1x8x8xf32>
    %25 = vector.shape_cast %24 : vector<1x8x8xf32> to vector<8x8xf32>
    %26 = vector.shape_cast %23 : vector<8x8xf32> to vector<1x8x8xf32>
    tpu.vector_store %arg5[%c0_35, %c0_36, %c0_37], %26 {strides = array<i32>} : memref<1x8x8xf32, #tpu.memory_space<vmem>>, vector<1x8x8xf32>,
    return
  }
  func.func @transform_0(%arg0: i32, %arg1: i32) -> (i32, i32, i32, i32, i32) {
    %c0_i32 = arith.constant 0 : i32
    %c0_i32_0 = arith.constant 0 : i32
    %c0_i32_1 = arith.constant 0 : i32
    %c0_i32_2 = arith.constant 0 : i32
    return %arg0, %arg1, %c0_i32, %c0_i32_0, %c0_i32_1 : i32, i32, i32, i32, i32
  }
  func.func @transform_1(%arg0: i32, %arg1: i32) -> (i32, i32) {
    %c0_i32 = arith.constant 0 : i32
    %c0_i32_0 = arith.constant 0 : i32
    %c0_i32_1 = arith.constant 0 : i32
    return %c0_i32, %c0_i32_0 : i32, i32
  }
  func.func @transform_2(%arg0: i32, %arg1: i32) -> (i32, i32) {
    %c0_i32 = arith.constant 0 : i32
    %c0_i32_0 = arith.constant 0 : i32
    %c0_i32_1 = arith.constant 0 : i32
    return %c0_i32, %c0_i32_0 : i32, i32
  }
  func.func @transform_3(%arg0: i32, %arg1: i32) -> (i32, i32, i32) {
    %c0_i32 = arith.constant 0 : i32
    %c0_i32_0 = arith.constant 0 : i32
    return %arg0, %arg1, %c0_i32 : i32, i32, i32
  }
}

</mosaic_0001>

<llo_original>
// kernel: tpu_custom_call.1
$region0: #{tpu_custom_call.1}
  #allocation0 [shape = 'u32[]', space=smem, size = 0x4, offset = 0x4, fixed_abs, tag = 'smem constant byte address 0x4 - core index']
  #allocation1 [shape = 'u32[144,128]{1,0:T(1,128)}', space=vmem, size = 0x12000, scoped, tag = 'internal scratch']
  %s0 = inlined_call_operand.vmem [shape: bf16[2,1,2,10,4], index: 0, kind: input, shape index: {}]
  %s1 = inlined_call_operand.vmem [shape: bf16[12,8], index: 1, kind: input, shape index: {}]
  %s2 = inlined_call_operand.vmem [shape: f32[1,8], index: 2, kind: input, shape index: {}]
  %s3 = inlined_call_operand.hbm [shape: f32[2,8,8], index: 3, kind: output, shape index: {}]
  %s4 = sld [smem:[#allocation0]]
  $region45: #{tpu_custom_call.1} parent=0
    _
  %s6 = ssub.s32 1, %s4
  %s7 = scalar_select 0, %s6, %s4
  $region1: #{tpu_custom_call.1} parent=0
    #allocation2 [shape = 'u8[8192]{0}', space=vmem, size = 0x2000, scoped, tag = 'output window, operand 0']
    #allocation3 [shape = 's32[2]{0}', space=sflag, size = 0x8, scoped, tag = 'scoped memory for tpu_custom_call.1']
    %8 = vsyncpa [#allocation3], 0
    %s9 = scalar_lea.sflag [#allocation3], 1
    %10 = vsyncpa %s9, 0
    loop: start=0, step=1, limit=4
    $region2: #{tpu_custom_call.1} parent=1 // loop_pre_header
      _
    $region3: #{tpu_custom_call.1} parent=1 // loop_header
      %s12 = sphi 0, %s16
      %p13 = scmp.ge.s32.totalorder %s12, 4
      %s19 = sphi 0, %s31
      %s20 = sphi 0, %s27
      %s21 = sphi 0, %s19
      %s22 = sphi 0, %s20
      %s23 = sphi 0, %s21
      %s24 = sphi 0, %s22
      %s36 = sphi 0, %s38
      %s39 = sphi 0, %s36
      %s40 = sphi 0, %s39
      %s56 = sphi 0, %s40
      %s60 = sphi 0, %s60
      %s62 = sphi 0, %s60
      %s63 = sphi 0, %s62
      %s77 = sphi 0, %s63
      %s81 = sphi 0, %s81
      %s83 = sphi 0, %s81
      %s84 = sphi 0, %s83
      %s98 = sphi 0, %s84
      %s106 = sphi 0, %s108
      %s109 = sphi 0, %s106
      %s110 = sphi 0, %s109
      %s126 = sphi 0, %s110
    $region4: #{tpu_custom_call.1} parent=1 // loop_header_branch
      %15 = sbr.rel (%p13) target = $region8
    $region5: #{tpu_custom_call.1} parent=1 // loop_body
      %s17 = ssub.s32 %s12, 1
      %s18 = ssub.s32 %s12, 2
      %s25 = sadd.s32 1, %s20
      %p26 = scmp.ge.s32.totalorder %s25, 1
      %s27 = scalar_select %p26, 0, %s25
      %s28 = sadd.s32 1, %s19
      %s29 = scalar_select %p26, %s28, %s19
      %p30 = scmp.ge.s32.totalorder %s29, 2
      %s31 = scalar_select %p30, 0, %s29
      %s32 = ssub.s32 %s19, %s31
      %s33 = ssub.s32 %s20, %s27
      %s34 = sor.u32 %s32, %s33
      %p35 = scmp.eq.s32.totalorder %s34, 0
      %s37 = sadd.s32 %s36, 1
      %s38 = scalar_select %p35, %s36, %s37
      %p41 = pneg %p35
      %p42 = scmp.eq.s32.totalorder %s12, 1
      %p43 = por %p41, %p42
      %p44 = scmp.ne.s32.totalorder %s36, %s39
      %p45 = scmp.eq.s32.totalorder %s12, 0
      %p46 = por %p44, %p45
      %p47 = scmp.ne.s32.totalorder %s36, %s39
      %p48 = scmp.eq.s32.totalorder %s17, 1
      %p49 = por %p47, %p48
      %p50 = scmp.ne.s32.totalorder %s39, %s40
      %p51 = scmp.eq.s32.totalorder %s17, 0
      %p52 = por %p50, %p51
      %p53 = scmp.ne.s32.totalorder %s39, %s40
      %p54 = scmp.eq.s32.totalorder %s18, 1
      %p55 = por %p53, %p54
      %p57 = scmp.ne.s32.totalorder %s40, %s56
      %p58 = scmp.eq.s32.totalorder %s18, 0
      %p59 = por %p57, %p58
      %s61 = sadd.s32 %s60, 1
      %p64 = scmp.eq.s32.totalorder %s12, 1
      %p65 = scmp.ne.s32.totalorder %s60, %s62
      %p66 = scmp.eq.s32.totalorder %s12, 0
      %p67 = por %p65, %p66
      %p68 = scmp.ne.s32.totalorder %s60, %s62
      %p69 = scmp.eq.s32.totalorder %s17, 1
      %p70 = por %p68, %p69
      %p71 = scmp.ne.s32.totalorder %s62, %s63
      %p72 = scmp.eq.s32.totalorder %s17, 0
      %p73 = por %p71, %p72
      %p74 = scmp.ne.s32.totalorder %s62, %s63
      %p75 = scmp.eq.s32.totalorder %s18, 1
      %p76 = por %p74, %p75
      %p78 = scmp.ne.s32.totalorder %s63, %s77
      %p79 = scmp.eq.s32.totalorder %s18, 0
      %p80 = por %p78, %p79
      %s82 = sadd.s32 %s81, 1
      %p85 = scmp.eq.s32.totalorder %s12, 1
      %p86 = scmp.ne.s32.totalorder %s81, %s83
      %p87 = scmp.eq.s32.totalorder %s12, 0
      %p88 = por %p86, %p87
      %p89 = scmp.ne.s32.totalorder %s81, %s83
      %p90 = scmp.eq.s32.totalorder %s17, 1
      %p91 = por %p89, %p90
      %p92 = scmp.ne.s32.totalorder %s83, %s84
      %p93 = scmp.eq.s32.totalorder %s17, 0
      %p94 = por %p92, %p93
      %p95 = scmp.ne.s32.totalorder %s83, %s84
      %p96 = scmp.eq.s32.totalorder %s18, 1
      %p97 = por %p95, %p96
      %p99 = scmp.ne.s32.totalorder %s84, %s98
      %p100 = scmp.eq.s32.totalorder %s18, 0
      %p101 = por %p99, %p100
      %s102 = ssub.s32 %s19, %s31
      %s103 = ssub.s32 %s20, %s27
      %s104 = sor.u32 %s102, %s103
      %p105 = scmp.eq.s32.totalorder %s104, 0
      %s107 = sadd.s32 %s106, 1
      %s108 = scalar_select %p105, %s106, %s107
      %p111 = pneg %p105
      %p112 = scmp.eq.s32.totalorder %s12, 1
      %p113 = por %p111, %p112
      %p114 = scmp.ne.s32.totalorder %s106, %s109
      %p115 = scmp.eq.s32.totalorder %s12, 0
      %p116 = por %p114, %p115
      %p117 = scmp.ne.s32.totalorder %s106, %s109
      %p118 = scmp.eq.s32.totalorder %s17, 1
      %p119 = por %p117, %p118
      %p120 = scmp.ne.s32.totalorder %s109, %s110
      %p121 = scmp.eq.s32.totalorder %s17, 0
      %p122 = por %p120, %p121
      %p123 = scmp.ne.s32.totalorder %s109, %s110
      %p124 = scmp.eq.s32.totalorder %s18, 1
      %p125 = por %p123, %p124
      %p127 = scmp.ne.s32.totalorder %s110, %s126
      %p128 = scmp.eq.s32.totalorder %s18, 0
      %p129 = por %p127, %p128
      %p130 = scmp.le.s32.totalorder 1, %s12
      %p131 = scmp.lt.s32.totalorder %s12, 3
      %p132 = pnand %p130, %p131
      %p133 = pneg %p132
      // Predicated region
      $region9: #{tpu_custom_call.1} parent=5 // pred_check
        _
      $region10: #{tpu_custom_call.1} parent=5 // pred_check_branch
        %135 = sbr.rel (%p132) target = $region12
      $region11: #{tpu_custom_call.1} parent=5 // pred_region
        %s136 = ssub.s32 %s12, 1
        // Predicated region
        $region13: #{tpu_custom_call.1} parent=11 // pred_check
          %p137 = pneg %p73
        $region14: #{tpu_custom_call.1} parent=11 // pred_check_branch
          %139 = sbr.rel (%p137) target = $region16
        $region15: #{tpu_custom_call.1} parent=11 // pred_region
          _
        $region16: #{tpu_custom_call.1} parent=11 // pred_fallthru
          _
        // Predicated region
        $region17: #{tpu_custom_call.1} parent=11 // pred_check
          %p140 = pneg %p94
        $region18: #{tpu_custom_call.1} parent=11 // pred_check_branch
          %142 = sbr.rel (%p140) target = $region20
        $region19: #{tpu_custom_call.1} parent=11 // pred_region
          _
        $region20: #{tpu_custom_call.1} parent=11 // pred_fallthru
          _
      $region12: #{tpu_custom_call.1} parent=5 // pred_fallthru
        _
      %p143 = scmp.lt.s32.totalorder %s12, 2
      // Predicated region
      $region21: #{tpu_custom_call.1} parent=5 // pred_check
        %p144 = pneg %p143
      $region22: #{tpu_custom_call.1} parent=5 // pred_check_branch
        %146 = sbr.rel (%p144) target = $region24
      $region23: #{tpu_custom_call.1} parent=5 // pred_region
        // Predicated region
        $region25: #{tpu_custom_call.1} parent=23 // pred_check
          %p147 = pneg %p46
        $region26: #{tpu_custom_call.1} parent=23 // pred_check_branch
          %149 = sbr.rel (%p147) target = $region28
        $region27: #{tpu_custom_call.1} parent=23 // pred_region
          %p150 = scmp.lt.s32.totalorder %s19, 1
          %s151 = scalar_select %p150, %s19, 1
          %p152 = scmp.lt.s32.totalorder %s20, 0
          %s153 = scalar_select %p152, %s20, 0
          %s154 = smul.addr %s153, 4
          %s155 = smul.addr %s151, 4
          %s156 = sadd.s32 %s154, %s155
          %s157 = smul.addr %s156, 4
          %s158 = scalar_lea.vmem %s0, %s157
        $region28: #{tpu_custom_call.1} parent=23 // pred_fallthru
          _
      $region24: #{tpu_custom_call.1} parent=5 // pred_fallthru
        _
      %p159 = scmp.le.s32.totalorder 1, %s12
      %p160 = scmp.lt.s32.totalorder %s12, 3
      %p161 = pnand %p159, %p160
      %p162 = pneg %p161
      // Predicated region
      $region29: #{tpu_custom_call.1} parent=5 // pred_check
        _
      $region30: #{tpu_custom_call.1} parent=5 // pred_check_branch
        %164 = sbr.rel (%p161) target = $region32
      $region31: #{tpu_custom_call.1} parent=5 // pred_region
        %s165 = ssub.s32 %s12, 1
        %p166 = scmp.lt.s32.totalorder %s21, 1
        %s167 = scalar_select %p166, %s21, 1
        %p168 = scmp.lt.s32.totalorder %s22, 0
        %s169 = scalar_select %p168, %s22, 0
        %s170 = smul.addr %s169, 4
        %s171 = smul.addr %s167, 4
        %s172 = sadd.s32 %s170, %s171
        %s173 = smul.addr %s172, 4
        %s174 = scalar_lea.vmem %s0, %s173
        %p175 = pneg %p52
        %p176 = pneg %p49
        %p177 = pneg %p73
        %p178 = pneg %p70
        %p179 = pneg %p94
        %p180 = pneg %p91
        %p181 = pneg %p122
        %p182 = pneg %p119
        %s183 = sand.u32 %s109, 1
        %s184 = scalar_lea.sflag [#allocation3], %s183
        %s185 = sand.u32 %s109, 1
        %s186 = smul.addr %s185, 8
        %s187 = scalar_lea.vmem [#allocation2], %s186
        %p188 = scmp.lt.s32.totalorder %s21, 1
        %s189 = scalar_select %p188, %s21, 1
        %p190 = scmp.lt.s32.totalorder %s22, 0
        %s191 = scalar_select %p190, %s22, 0
        %s192 = smul.addr %s191, 4
        %s193 = smul.addr %s189, 4
        %s194 = sadd.s32 %s192, %s193
        %s195 = smul.addr %s194, 4
        %s196 = scalar_lea.vmem %s0, %s195
        %s198 = scalar_lea.vmem %s196, 8
        %v199 = vld [vmem:[%s198] sm:$0xf]
        %v200 = vld [vmem:[%s196] sm:$0xf]
        %v201 = vld [vmem:[%s196 + $0x4] sm:$0x1]
        %v202 = vld [vmem:[%s198 + $0x4] sm:$0x1]
        %v205 = vunpack.c.l.b16 %v200
        %v206 = vunpack.c.l.b16 %v201
        %v207 = vpack.c.b16 %v206, %v205
        %v209 = vshrl.u32 %v207, 16
        %v211 = vshll.u32 %v207, 16
        %v213 = vrot.slane %v211, 1
        %v214 = vor.u32 %v209, %v213
        %215 = vrot.lane.b32.xlu0 %v214, 4
        %v216 = vpop.permute.xlu0 %215
        %v219 = vunpack.c.l.b16 %v199
        %v220 = vunpack.c.l.b16 %v202
        %v221 = vpack.c.b16 %v220, %v219
        %v223 = vshrl.u32 %v221, 16
        %v225 = vshll.u32 %v221, 16
        %v227 = vrot.slane %v225, 1
        %v228 = vor.u32 %v223, %v227
        %229 = vrot.lane.b32.xlu0 %v228, 8
        %v230 = vpop.permute.xlu0 %229
        %vm231 = vcmask 31744
        %v234 = vsel %vm231, %v199, %v216
        %vm235 = vcmask 64512
        %v237 = vsel %vm235, %v234, %v230
        %v238 = vld [vmem:[%s1] sm:$0xf]
        %v239 = vld [vmem:[%s1 + $0x4] sm:$0x3]
        %v242 = vunpack.c.l.b16 %v238
        %v243 = vunpack.c.l.b16 %v239
        %v244 = vpack.c.b16 %v243, %v242
        %vm245 = vcmask 97280
        %v246 = vsel %vm245, %v237, 0
        %vm248 = vcmask 1045504
        %v250 = vsel %vm248, %v244, 0
        %252 = vmatprep.subr.bf16.mxu0 0
        %253 = vmatpush1.bf16.msra.mxu0 0
        %254 = vmatprep.subr.bf16.mxu0 0
        %255 = vmatpush1.bf16.msra.mxu0 0
        %256 = vmatprep.subr.bf16.mxu0 0
        %257 = vmatpush1.bf16.msra.mxu0 0
        %258 = vmatprep.subr.bf16.mxu0 0
        %259 = vmatpush1.bf16.msra.mxu0 0
        %260 = vmatprep.subr.bf16.mxu0 0
        %261 = vmatpush1.bf16.msra.mxu0 0
        %262 = vmatprep.subr.bf16.mxu0 0
        %263 = vmatpush1.bf16.msra.mxu0 0
        %264 = vmatprep.subr.bf16.mxu0 0
        %265 = vmatpush1.bf16.msra.mxu0 0
        %266 = vmatprep.subr.bf16.mxu0 0
        %267 = vmatpush1.bf16.msra.mxu0 %v250
        %268 = vmatprep.subr.bf16.mxu0 0
        %269 = vmatpush2.bf16.msra.mxu0 0
        %270 = vmatprep.subr.bf16.mxu0 0
        %271 = vmatpush2.bf16.msra.mxu0 0
        %272 = vmatprep.subr.bf16.mxu0 0
        %273 = vmatpush2.bf16.msra.mxu0 0
        %274 = vmatprep.subr.bf16.mxu0 0
        %275 = vmatpush2.bf16.msra.mxu0 0
        %276 = vmatprep.subr.bf16.mxu0 0
        %277 = vmatpush2.bf16.msra.mxu0 0
        %278 = vmatprep.subr.bf16.mxu0 0
        %279 = vmatpush2.bf16.msra.mxu0 0
        %280 = vmatprep.subr.bf16.mxu0 0
        %281 = vmatpush2.bf16.msra.mxu0 0
        %282 = vmatprep.subr.bf16.mxu0 0
        %283 = vmatpush2.bf16.msra.mxu0 0
        %284 = vmatprep.mubr.bf16.mxu0 0
        %285 = vmatmul.mubr.bf16.gmra.mxu0 %v246
        %v286 = vpop.f32.mrf.mxu0
        %v287 = vadd.f32 0.0, %v286
        %v288 = vpop.f32.mrf.mxu0
        %v289 = vpop.f32.mrf.mxu0
        %v290 = vpop.f32.mrf.mxu0
        %291 = vdwg.mxu0
        %v292 = vld [vmem:[%s196] sm:$0xe]
        %293 = vrot.lane.b32.xlu0 %v221, 4
        %v294 = vpop.permute.xlu0 %293
        %v296 = vunpack.c.l.b16 %v292
        %v297 = vpack.c.b16 %v206, %v296
        %v299 = vshrl.u32 %v297, 16
        %v301 = vshll.u32 %v297, 16
        %v303 = vrot.slane %v301, 1
        %v304 = vor.u32 %v299, %v303
        %305 = vrot.lane.b32.xlu0 %v304, 8
        %v306 = vpop.permute.xlu0 %305
        %v308 = vsel %vm231, %v207, %v294
        %v310 = vsel %vm235, %v308, %v306
        %v311 = vshrl.u32 %v310, 16
        %v313 = vshll.u32 %v310, 16
        %v315 = vrot.slane %v313, 1
        %v316 = vor.u32 %v311, %v315
        %v318 = vsel %vm245, %v316, 0
        %320 = vmatprep.subr.bf16.mxu0 0
        %321 = vmatpush1.bf16.msra.mxu0 0
        %322 = vmatprep.subr.bf16.mxu0 0
        %323 = vmatpush1.bf16.msra.mxu0 0
        %324 = vmatprep.subr.bf16.mxu0 0
        %325 = vmatpush1.bf16.msra.mxu0 0
        %326 = vmatprep.subr.bf16.mxu0 0
        %327 = vmatpush1.bf16.msra.mxu0 0
        %328 = vmatprep.subr.bf16.mxu0 0
        %329 = vmatpush1.bf16.msra.mxu0 0
        %330 = vmatprep.subr.bf16.mxu0 0
        %331 = vmatpush1.bf16.msra.mxu0 0
        %332 = vmatprep.subr.bf16.mxu0 0
        %333 = vmatpush1.bf16.msra.mxu0 0
        %334 = vmatprep.subr.bf16.mxu0 0
        %335 = vmatpush1.bf16.msra.mxu0 %v250
        %336 = vmatprep.subr.bf16.mxu0 0
        %337 = vmatpush2.bf16.msra.mxu0 0
        %338 = vmatprep.subr.bf16.mxu0 0
        %339 = vmatpush2.bf16.msra.mxu0 0
        %340 = vmatprep.subr.bf16.mxu0 0
        %341 = vmatpush2.bf16.msra.mxu0 0
        %342 = vmatprep.subr.bf16.mxu0 0
        %343 = vmatpush2.bf16.msra.mxu0 0
        %344 = vmatprep.subr.bf16.mxu0 0
        %345 = vmatpush2.bf16.msra.mxu0 0
        %346 = vmatprep.subr.bf16.mxu0 0
        %347 = vmatpush2.bf16.msra.mxu0 0
        %348 = vmatprep.subr.bf16.mxu0 0
        %349 = vmatpush2.bf16.msra.mxu0 0
        %350 = vmatprep.subr.bf16.mxu0 0
        %351 = vmatpush2.bf16.msra.mxu0 0
        %352 = vmatprep.mubr.bf16.mxu0 0
        %353 = vmatmul.mubr.bf16.gmra.mxu0 %v318
        %v354 = vpop.f32.mrf.mxu0
        %v355 = vadd.f32 0.0, %v354
        %v356 = vpop.f32.mrf.mxu0
        %v357 = vpop.f32.mrf.mxu0
        %v358 = vpop.f32.mrf.mxu0
        %359 = vdwg.mxu0
        %v360 = vmax.f32 %v287, %v355
        %v361 = vld [vmem:[%s2] sm:$0x1]
        %v363 = vlaneseq
        %v364 = vshrl.u32 %v363, 7
        %v365 = vsub.s32 0, %v364
        %v366 = vrot.slane %v361, %v365
        %v368 = vadd.f32 %v360, %v366
        %v369 = vmax.f32 %v368, 0.0
        %370 = vst.msk [vmem:[%s187] sm:$0xff] %vm235, %v369
        %s371 = sand.u32 %s109, 1
        %s372 = scalar_lea.sflag [#allocation3], %s371
        %s373 = sand.u32 %s109, 1
        %s374 = smul.addr %s373, 8
        %s375 = scalar_lea.vmem [#allocation2], %s374
        // Predicated region
        $region33: #{tpu_custom_call.1} parent=31 // pred_check
          %p376 = pneg %p119
        $region34: #{tpu_custom_call.1} parent=31 // pred_check_branch
          %378 = sbr.rel (%p376) target = $region36
        $region35: #{tpu_custom_call.1} parent=31 // pred_region
          %s380 = ssub.s32 128, 128
          %381 = vsyncadd %s372, %s380
          %s382 = sadd.s32 %s22, %s21
          %s383 = smul.addr %s382, 128
          %s384 = scalar_lea.hbm %s3, %s383
          %s386 = sshll.u32 %s375, 4
          %s387 = int_to_ptr.vmem [resolvable:$true] %s386
          %389 = dma.vmem_to_hbm [thread:$0]  %s387, 128, %s384, %s372
        $region36: #{tpu_custom_call.1} parent=31 // pred_fallthru
          _
      $region32: #{tpu_custom_call.1} parent=5 // pred_fallthru
        _
      %p390 = scmp.le.s32.totalorder 2, %s12
      // Predicated region
      $region37: #{tpu_custom_call.1} parent=5 // pred_check
        %p391 = pneg %p390
      $region38: #{tpu_custom_call.1} parent=5 // pred_check_branch
        %393 = sbr.rel (%p391) target = $region40
      $region39: #{tpu_custom_call.1} parent=5 // pred_region
        %s394 = ssub.s32 %s12, 2
        // Predicated region
        $region41: #{tpu_custom_call.1} parent=39 // pred_check
          %p395 = pneg %p125
        $region42: #{tpu_custom_call.1} parent=39 // pred_check_branch
          %397 = sbr.rel (%p395) target = $region44
        $region43: #{tpu_custom_call.1} parent=39 // pred_region
          %s398 = sand.u32 %s110, 1
          %s399 = scalar_lea.sflag [#allocation3], %s398
          %s400 = sand.u32 %s110, 1
          %s401 = smul.addr %s400, 8
          %s402 = scalar_lea.vmem [#allocation2], %s401
          %403 = dma.done %s399, 128
        $region44: #{tpu_custom_call.1} parent=39 // pred_fallthru
          _
      $region40: #{tpu_custom_call.1} parent=5 // pred_fallthru
        _
    $region6: #{tpu_custom_call.1} parent=1 // loop_footer
      %s16 = sadd.s32 1, %s12
    $region7: #{tpu_custom_call.1} parent=1 // loop_footer_branch
      %11 = sbr.rel target = $region3
    $region8: #{tpu_custom_call.1} parent=1 // loop_exit
      _
    %404 = vsyncpa [#allocation3], 1
    %s405 = scalar_lea.sflag [#allocation3], 1
    %406 = vsyncpa %s405, 1

</llo_original>
